<compile_context>
chip_gen: v6e
topology: v6e:2x2x1
jax: 0.10.0
libtpu: 0.0.40
codegen_flags: <defaults>
</compile_context>

<pallas_src>
import functools

import jax
import jax.numpy as jnp
import numpy as np
from jax import lax
from jax.experimental import pallas as pl
from jax.experimental.pallas import tpu as pltpu

LANES = 128
C_CHUNK = 8          # static channel-chunk for the class-score loop


def _cdiv(a, b):
    return -(-a // b)


def _ceil8(c):
    return ((c + 7) // 8) * 8


# ----------------------------- Pallas kernel ------------------------------ #
def _level_kernel(*refs, w, stride, tile_n, add_centerness, c_chunk, fast_sigmoid):
    """One FPN level, blocks over the flattened spatial axis N = h*w.

      cls_ref     : (1, C, TILE_N)   class logits
      cnt_ref     : (1, 1, TILE_N)   centerness logits  (only if add_centerness)
      reg_ref     : (1, 4, TILE_N)   l,t,r,b offsets
      cls_out_ref : (1, C, TILE_N)
      box_out_ref : (1, 4, TILE_N)   x1,y1,x2,y2
    """
    if add_centerness:
        cls_ref, cnt_ref, reg_ref, cls_out_ref, box_out_ref = refs
    else:
        cls_ref, reg_ref, cls_out_ref, box_out_ref = refs

    f32 = jnp.float32

    def sigmoid(x):
        e = jnp.exp(-x)
        if fast_sigmoid:
            # EUP approximate reciprocal: relieves the transcendental slot for
            # large C on v7x; skipped by default to keep bit-accuracy.
            return pl.reciprocal(1.0 + e, approx=True)
        return 1.0 / (1.0 + e)

    # ---- class scores: sigmoid (+ centerness sqrt), chunked over channels ----
    # Chunking bounds the live f32 intermediate (vreg/VMEM pressure) with zero
    # extra HBM traffic; sigmoid(cnt) is hoisted once per tile.
    if add_centerness:
        cnt_s = sigmoid(cnt_ref[0].astype(f32))                    # (1, TILE_N)
    C = cls_ref.shape[1]
    for c0 in range(0, C, c_chunk):
        c1 = min(c0 + c_chunk, C)
        s = sigmoid(cls_ref[0, c0:c1, :].astype(f32))              # (cc, TILE_N)
        if add_centerness:
            s = jnp.sqrt(s * cnt_s)                                # bcast over cc
        cls_out_ref[0, c0:c1, :] = s.astype(cls_out_ref.dtype)

    # ---- in-kernel center coords (no HBM coords input) ----
    # Flat position within this level for every lane of the tile.  Exact in
    # f32 because the wrapper asserts h*w <= 2**22.
    p = (pl.program_id(1) * tile_n
         + lax.broadcasted_iota(jnp.int32, (1, tile_n), 1)).astype(f32)
    # +0.5 guards the floor against the ulp error of the f32 multiply.
    fr = jnp.floor((p + 0.5) * (1.0 / float(w)))                   # row in fmap
    fc = p - fr * float(w)                                         # col in fmap
    half = float(stride // 2)
    cx = fc * float(stride) + half                                 # (1, TILE_N)
    cy = fr * float(stride) + half

    # ---- boxes: lane-dense (1, TILE_N) ops per ltrb channel ----
    od = box_out_ref.dtype
    box_out_ref[0, 0:1, :] = (cx - reg_ref[0, 0:1, :].astype(f32)).astype(od)
    box_out_ref[0, 1:2, :] = (cy - reg_ref[0, 1:2, :].astype(f32)).astype(od)
    box_out_ref[0, 2:3, :] = (cx + reg_ref[0, 2:3, :].astype(f32)).astype(od)
    box_out_ref[0, 3:4, :] = (cy + reg_ref[0, 3:4, :].astype(f32)).astype(od)


# ------------------------------- JAX glue ---------------------------------- #
def _vmem_capacity_bytes():
    """Generation-aware VMEM capacity; fall back to 64 MiB (v7x, the smallest)."""
    try:
        cap = int(getattr(pltpu.get_tpu_info(), "vmem_capacity_bytes"))
        if cap > 0:
            return cap
    except Exception:
        pass
    return 64 * 2 ** 20


def _pick_tiling(N, B, C, bytes_in, bytes_out, vmem_cap):
    """Pick (tile_n, num_tiles) for one level from the VMEM budget.

    bytes_in / bytes_out: VMEM bytes per element of N for the in/out blocks
    (sublane padding of the small-channel tensors included).
    """
    budget = min(int(vmem_cap * 0.6), 96 * 2 ** 20)   # headroom for compiler scratch
    per_elem = 2 * (bytes_in + bytes_out) + 4 * (min(C, C_CHUNK) + 6)  # dbl-buf + f32 temps
    tile_n = max(LANES, (budget // per_elem) // LANES * LANES)
    # Keep >= ~4 total grid steps when there is data: feeds both v7x TCs and
    # gives the double-buffer pipeline something to overlap.
    want_tiles = min(_cdiv(4, B), _cdiv(N, LANES))
    num_tiles = max(_cdiv(N, tile_n), max(want_tiles, 1))
    tile_n = _cdiv(_cdiv(N, num_tiles), LANES) * LANES
    if tile_n >= N:
        return N, 1            # full-extent block: always layout-legal
    return tile_n, _cdiv(N, tile_n)


def _detect_head_level(cls_l, cnt_l, reg_l, stride, add_centerness,
                       fast_sigmoid, vmem_cap):
    """One pallas_call per FPN level; inputs are free reshape views (no copy)."""
    B, C, h, w = (int(d) for d in cls_l.shape)
    N = h * w
    if N > (1 << 22):
        raise ValueError("per-level h*w too large for exact f32 coordinate generation")

    cls_f = cls_l.reshape(B, C, N)                     # layout-preserving views
    reg_f = reg_l.reshape(B, 4, N)
    cnt_f = cnt_l.reshape(B, 1, N) if add_centerness else None

    cls_it = jnp.dtype(cls_f.dtype).itemsize
    reg_it = jnp.dtype(reg_f.dtype).itemsize
    cnt_it = jnp.dtype(cnt_f.dtype).itemsize if add_centerness else 0
    bytes_in = _ceil8(C) * cls_it + (8 * cnt_it if add_centerness else 0) + 8 * reg_it
    bytes_out = _ceil8(C) * cls_it + 8 * reg_it
    tile_n, num_tiles = _pick_tiling(N, B, C, bytes_in, bytes_out, vmem_cap)

    per_step = tile_n * (bytes_in + bytes_out)
    vmem_limit = int(min(max(3 * per_step, 32 * 2 ** 20), int(vmem_cap * 0.9)))

    kernel = functools.partial(
        _level_kernel, w=w, stride=int(stride), tile_n=tile_n,
        add_centerness=add_centerness, c_chunk=C_CHUNK, fast_sigmoid=fast_sigmoid)

    idx = lambda b, t: (b, 0, t)
    in_specs = [pl.BlockSpec((1, C, tile_n), idx)]
    inputs = [cls_f]
    if add_centerness:
        in_specs.append(pl.BlockSpec((1, 1, tile_n), idx))
        inputs.append(cnt_f)
    in_specs.append(pl.BlockSpec((1, 4, tile_n), idx))
    inputs.append(reg_f)

    cls_out, box_out = pl.pallas_call(
        kernel,
        out_shape=(jax.ShapeDtypeStruct((B, C, N), cls_f.dtype),
                   jax.ShapeDtypeStruct((B, 4, N), reg_f.dtype)),
        grid=(B, num_tiles),
        in_specs=in_specs,
        out_specs=(pl.BlockSpec((1, C, tile_n), idx),
                   pl.BlockSpec((1, 4, tile_n), idx)),
        compiler_params=pltpu.CompilerParams(
            dimension_semantics=("parallel", "parallel"),
            vmem_limit_bytes=vmem_limit),
    )(*inputs)
    return cls_out, box_out


def detect_head_forward(cls_logits, cnt_logits, reg_preds, strides,
                        add_centerness=True, fast_sigmoid=False,
                        channel_major_output=False):
    """cls_logits/cnt_logits/reg_preds: lists of NCHW arrays (one per level).

    Returns (cls_preds [B,N,C], boxes [B,N,4]) like the PyTorch module, unless
    channel_major_output=True (returns per-level [B,C,N_l]/[B,4,N_l] lists with
    zero extra HBM passes, for consumers that can fuse the permute).
    """
    vmem_cap = _vmem_capacity_bytes()
    cls_outs, box_outs = [], []
    for cls_l, cnt_l, reg_l, s in zip(cls_logits, cnt_logits, reg_preds, strides):
        c_o, b_o = _detect_head_level(cls_l, cnt_l, reg_l, s, add_centerness,
                                      fast_sigmoid, vmem_cap)
        cls_outs.append(c_o)
        box_outs.append(b_o)

    if channel_major_output:
        return cls_outs, box_outs

    # PyTorch output layout [B,N,C]/[B,N,4]: one XLA pass over the outputs only
    # (the permute+concat fuse); writing channel-last from the kernel would
    # force 4/C-lane masked stores, which is worse.
    cls_preds = jnp.concatenate(
        [jnp.transpose(o, (0, 2, 1)) for o in cls_outs], axis=1)
    boxes = jnp.concatenate(
        [jnp.transpose(o, (0, 2, 1)) for o in box_outs], axis=1)
    return cls_preds, boxes


# ------------------------------ reference ---------------------------------- #
def _sigmoid_ref(x):
    return 1.0 / (1.0 + jnp.exp(-x))


def _coords_fmap2orig(h, w, stride):
    shift_x = jnp.arange(0, w * stride, stride, dtype=jnp.float32)
    shift_y = jnp.arange(0, h * stride, stride, dtype=jnp.float32)
    sy, sx = jnp.meshgrid(shift_y, shift_x, indexing="ij")
    cx = sx.reshape(-1) + stride // 2
    cy = sy.reshape(-1) + stride // 2
    return jnp.stack([cx, cy], axis=0)


def _reference_forward(cls_logits, cnt_logits, reg_preds, strides, add_centerness):
    B, C = cls_logits[0].shape[0], cls_logits[0].shape[1]
    cls_cat = jnp.concatenate(
        [jnp.transpose(x, (0, 2, 3, 1)).reshape(B, -1, C) for x in cls_logits], axis=1)
    cnt_cat = jnp.concatenate(
        [jnp.transpose(x, (0, 2, 3, 1)).reshape(B, -1, 1) for x in cnt_logits], axis=1)
    reg_cat = jnp.concatenate(
        [jnp.transpose(x, (0, 2, 3, 1)).reshape(B, -1, 4) for x in reg_preds], axis=1)
    coords = jnp.concatenate(
        [_coords_fmap2orig(x.shape[2], x.shape[3], s).T
         for x, s in zip(cls_logits, strides)], axis=0)                 # (N, 2)
    cls_p = _sigmoid_ref(cls_cat)
    cnt_p = _sigmoid_ref(cnt_cat)
    if add_centerness:
        cls_p = jnp.sqrt(cls_p * cnt_p)
    x1y1 = coords[None, :, :] - reg_cat[..., :2]
    x2y2 = coords[None, :, :] + reg_cat[..., 2:]
    boxes = jnp.concatenate([x1y1, x2y2], axis=-1)
    return cls_p, boxes


# --------------------------------- main ------------------------------------ #
if __name__ == "__main__":
    key = jax.random.PRNGKey(0)
    B, C = 2, 4
    strides = [8, 16, 32, 64, 128]
    img = 128
    sizes = [img // s for s in strides]          # 16, 8, 4, 2, 1

    keys = jax.random.split(key, 3 * len(strides))
    cls_logits, cnt_logits, reg_preds = [], [], []
    for i, hw in enumerate(sizes):
        cls_logits.append(
            jax.random.normal(keys[3 * i + 0], (B, C, hw, hw), jnp.float32))
        cnt_logits.append(
            jax.random.normal(keys[3 * i + 1], (B, 1, hw, hw), jnp.float32))
        # positive-ish ltrb offsets, like real regression outputs
        reg_preds.append(jnp.abs(
            jax.random.normal(keys[3 * i + 2], (B, 4, hw, hw), jnp.float32)) * strides[i])

    cls_preds, boxes = detect_head_forward(
        cls_logits, cnt_logits, reg_preds, strides, add_centerness=True)
    jax.block_until_ready((cls_preds, boxes))

    ref_cls, ref_boxes = _reference_forward(
        cls_logits, cnt_logits, reg_preds, strides, add_centerness=True)
    np.testing.assert_allclose(np.asarray(cls_preds), np.asarray(ref_cls),
                               rtol=1e-5, atol=1e-5)
    np.testing.assert_allclose(np.asarray(boxes), np.asarray(ref_boxes),
                               rtol=1e-5, atol=1e-5)

    print("KERNEL_OK")
</pallas_src>

<mosaic_0001>
module attributes {stable_mosaic.version = 11 : i64} {
  func.func @_level_kernel(%arg0: i32, %arg1: i32, %arg2: memref<1x4x128xf32, #tpu.memory_space<vmem>>, %arg3: memref<1x1x128xf32, #tpu.memory_space<vmem>>, %arg4: memref<1x4x128xf32, #tpu.memory_space<vmem>>, %arg5: memref<1x4x128xf32, #tpu.memory_space<vmem>>, %arg6: memref<1x4x128xf32, #tpu.memory_space<vmem>>) attributes {dimension_semantics = [#tpu.dimension_semantics<parallel>, #tpu.dimension_semantics<parallel>], iteration_bounds = array<i64: 2, 2>, scalar_prefetch = 0 : i64, scratch_operands = 0 : i64, tpu.core_type = #tpu.core_type<tc>, window_params = [{transform_indices = @transform_0, window_bounds = array<i64: 1, 4, 128>}, {transform_indices = @transform_1, window_bounds = array<i64: 1, 1, 128>}, {transform_indices = @transform_2, window_bounds = array<i64: 1, 4, 128>}, {transform_indices = @transform_3, window_bounds = array<i64: 1, 4, 128>}, {transform_indices = @transform_4, window_bounds = array<i64: 1, 4, 128>}]} {
    %c0 = arith.constant 0 : index
    %c0_0 = arith.constant 0 : index
    %c0_1 = arith.constant 0 : index
    %0 = vector.load %arg3[%c0, %c0_0, %c0_1] : memref<1x1x128xf32, #tpu.memory_space<vmem>>, vector<1x1x128xf32>
    %1 = vector.shape_cast %0 : vector<1x1x128xf32> to vector<1x128xf32>
    %cst = arith.constant 0.000000e+00 : f32
    %2 = vector.broadcast %cst : f32 to vector<1x128xf32>
    %3 = arith.subf %2, %1 : vector<1x128xf32>
    %4 = math.exp %3 : vector<1x128xf32>
    %cst_2 = arith.constant 1.000000e+00 : f32
    %5 = vector.broadcast %cst_2 : f32 to vector<1x128xf32>
    %6 = arith.addf %5, %4 : vector<1x128xf32>
    %cst_3 = arith.constant 1.000000e+00 : f32
    %7 = vector.broadcast %cst_3 : f32 to vector<1x128xf32>
    %8 = arith.divf %7, %6 : vector<1x128xf32>
    %c0_4 = arith.constant 0 : index
    %c0_5 = arith.constant 0 : index
    %c0_6 = arith.constant 0 : index
    %9 = vector.load %arg2[%c0_4, %c0_5, %c0_6] : memref<1x4x128xf32, #tpu.memory_space<vmem>>, vector<1x4x128xf32>
    %10 = vector.shape_cast %9 : vector<1x4x128xf32> to vector<4x128xf32>
    %cst_7 = arith.constant 0.000000e+00 : f32
    %11 = vector.broadcast %cst_7 : f32 to vector<4x128xf32>
    %12 = arith.subf %11, %10 : vector<4x128xf32>
    %13 = math.exp %12 : vector<4x128xf32>
    %cst_8 = arith.constant 1.000000e+00 : f32
    %14 = vector.broadcast %cst_8 : f32 to vector<4x128xf32>
    %15 = arith.addf %14, %13 : vector<4x128xf32>
    %cst_9 = arith.constant 1.000000e+00 : f32
    %16 = vector.broadcast %cst_9 : f32 to vector<4x128xf32>
    %17 = arith.divf %16, %15 : vector<4x128xf32>
    %18 = vector.broadcast %8 : vector<1x128xf32> to vector<4x128xf32>
    %19 = arith.mulf %17, %18 : vector<4x128xf32>
    %20 = math.sqrt %19 : vector<4x128xf32>
    %c0_10 = arith.constant 0 : index
    %c0_11 = arith.constant 0 : index
    %c0_12 = arith.constant 0 : index
    %21 = vector.load %arg5[%c0_10, %c0_11, %c0_12] : memref<1x4x128xf32, #tpu.memory_space<vmem>>, vector<1x4x128xf32>
    %22 = vector.shape_cast %21 : vector<1x4x128xf32> to vector<4x128xf32>
    %23 = vector.shape_cast %20 : vector<4x128xf32> to vector<1x4x128xf32>
    tpu.vector_store %arg5[%c0_10, %c0_11, %c0_12], %23 {strides = array<i32>} : memref<1x4x128xf32, #tpu.memory_space<vmem>>, vector<1x4x128xf32>,
    %c128_i32 = arith.constant 128 : i32
    %24 = arith.muli %arg1, %c128_i32 : i32
    %25 = tpu.iota {dimensions = array<i32: 1>} : vector<1x128xi32>
    %26 = vector.broadcast %24 : i32 to vector<1x128xi32>
    %27 = arith.addi %26, %25 : vector<1x128xi32>
    %28 = arith.sitofp %27 : vector<1x128xi32> to vector<1x128xf32>
    %cst_13 = arith.constant 5.000000e-01 : f32
    %29 = vector.broadcast %cst_13 : f32 to vector<1x128xf32>
    %30 = arith.addf %28, %29 : vector<1x128xf32>
    %cst_14 = arith.constant 6.250000e-02 : f32
    %31 = vector.broadcast %cst_14 : f32 to vector<1x128xf32>
    %32 = arith.mulf %30, %31 : vector<1x128xf32>
    %33 = math.floor %32 : vector<1x128xf32>
    %cst_15 = arith.constant 1.600000e+01 : f32
    %34 = vector.broadcast %cst_15 : f32 to vector<1x128xf32>
    %35 = arith.mulf %33, %34 : vector<1x128xf32>
    %36 = arith.subf %28, %35 : vector<1x128xf32>
    %cst_16 = arith.constant 8.000000e+00 : f32
    %37 = vector.broadcast %cst_16 : f32 to vector<1x128xf32>
    %38 = arith.mulf %36, %37 : vector<1x128xf32>
    %cst_17 = arith.constant 4.000000e+00 : f32
    %39 = vector.broadcast %cst_17 : f32 to vector<1x128xf32>
    %40 = arith.addf %38, %39 : vector<1x128xf32>
    %cst_18 = arith.constant 8.000000e+00 : f32
    %41 = vector.broadcast %cst_18 : f32 to vector<1x128xf32>
    %42 = arith.mulf %33, %41 : vector<1x128xf32>
    %cst_19 = arith.constant 4.000000e+00 : f32
    %43 = vector.broadcast %cst_19 : f32 to vector<1x128xf32>
    %44 = arith.addf %42, %43 : vector<1x128xf32>
    %c0_20 = arith.constant 0 : index
    %c0_21 = arith.constant 0 : index
    %c0_22 = arith.constant 0 : index
    %45 = vector.load %arg4[%c0_20, %c0_21, %c0_22] : memref<1x4x128xf32, #tpu.memory_space<vmem>>, vector<1x1x128xf32>
    %46 = vector.shape_cast %45 : vector<1x1x128xf32> to vector<1x128xf32>
    %47 = arith.subf %40, %46 : vector<1x128xf32>
    %c0_23 = arith.constant 0 : index
    %c0_24 = arith.constant 0 : index
    %c0_25 = arith.constant 0 : index
    %48 = vector.load %arg6[%c0_23, %c0_24, %c0_25] : memref<1x4x128xf32, #tpu.memory_space<vmem>>, vector<1x1x128xf32>
    %49 = vector.shape_cast %48 : vector<1x1x128xf32> to vector<1x128xf32>
    %50 = vector.shape_cast %47 : vector<1x128xf32> to vector<1x1x128xf32>
    tpu.vector_store %arg6[%c0_23, %c0_24, %c0_25], %50 {strides = array<i32>} : memref<1x4x128xf32, #tpu.memory_space<vmem>>, vector<1x1x128xf32>,
    %c0_26 = arith.constant 0 : index
    %c1 = arith.constant 1 : index
    %c0_27 = arith.constant 0 : index
    %51 = vector.load %arg4[%c0_26, %c1, %c0_27] : memref<1x4x128xf32, #tpu.memory_space<vmem>>, vector<1x1x128xf32>
    %52 = vector.shape_cast %51 : vector<1x1x128xf32> to vector<1x128xf32>
    %53 = arith.subf %44, %52 : vector<1x128xf32>
    %c0_28 = arith.constant 0 : index
    %c1_29 = arith.constant 1 : index
    %c0_30 = arith.constant 0 : index
    %54 = vector.load %arg6[%c0_28, %c1_29, %c0_30] : memref<1x4x128xf32, #tpu.memory_space<vmem>>, vector<1x1x128xf32>
    %55 = vector.shape_cast %54 : vector<1x1x128xf32> to vector<1x128xf32>
    %56 = vector.shape_cast %53 : vector<1x128xf32> to vector<1x1x128xf32>
    tpu.vector_store %arg6[%c0_28, %c1_29, %c0_30], %56 {strides = array<i32>} : memref<1x4x128xf32, #tpu.memory_space<vmem>>, vector<1x1x128xf32>,
    %c0_31 = arith.constant 0 : index
    %c2 = arith.constant 2 : index
    %c0_32 = arith.constant 0 : index
    %57 = vector.load %arg4[%c0_31, %c2, %c0_32] : memref<1x4x128xf32, #tpu.memory_space<vmem>>, vector<1x1x128xf32>
    %58 = vector.shape_cast %57 : vector<1x1x128xf32> to vector<1x128xf32>
    %59 = arith.addf %40, %58 : vector<1x128xf32>
    %c0_33 = arith.constant 0 : index
    %c2_34 = arith.constant 2 : index
    %c0_35 = arith.constant 0 : index
    %60 = vector.load %arg6[%c0_33, %c2_34, %c0_35] : memref<1x4x128xf32, #tpu.memory_space<vmem>>, vector<1x1x128xf32>
    %61 = vector.shape_cast %60 : vector<1x1x128xf32> to vector<1x128xf32>
    %62 = vector.shape_cast %59 : vector<1x128xf32> to vector<1x1x128xf32>
    tpu.vector_store %arg6[%c0_33, %c2_34, %c0_35], %62 {strides = array<i32>} : memref<1x4x128xf32, #tpu.memory_space<vmem>>, vector<1x1x128xf32>,
    %c0_36 = arith.constant 0 : index
    %c3 = arith.constant 3 : index
    %c0_37 = arith.constant 0 : index
    %63 = vector.load %arg4[%c0_36, %c3, %c0_37] : memref<1x4x128xf32, #tpu.memory_space<vmem>>, vector<1x1x128xf32>
    %64 = vector.shape_cast %63 : vector<1x1x128xf32> to vector<1x128xf32>
    %65 = arith.addf %44, %64 : vector<1x128xf32>
    %c0_38 = arith.constant 0 : index
    %c3_39 = arith.constant 3 : index
    %c0_40 = arith.constant 0 : index
    %66 = vector.load %arg6[%c0_38, %c3_39, %c0_40] : memref<1x4x128xf32, #tpu.memory_space<vmem>>, vector<1x1x128xf32>
    %67 = vector.shape_cast %66 : vector<1x1x128xf32> to vector<1x128xf32>
    %68 = vector.shape_cast %65 : vector<1x128xf32> to vector<1x1x128xf32>
    tpu.vector_store %arg6[%c0_38, %c3_39, %c0_40], %68 {strides = array<i32>} : memref<1x4x128xf32, #tpu.memory_space<vmem>>, vector<1x1x128xf32>,
    return
  }
  func.func @transform_0(%arg0: i32, %arg1: i32) -> (i32, i32, i32) {
    %c0_i32 = arith.constant 0 : i32
    %c0_i32_0 = arith.constant 0 : i32
    return %arg0, %c0_i32, %arg1 : i32, i32, i32
  }
  func.func @transform_1(%arg0: i32, %arg1: i32) -> (i32, i32, i32) {
    %c0_i32 = arith.constant 0 : i32
    %c0_i32_0 = arith.constant 0 : i32
    return %arg0, %c0_i32, %arg1 : i32, i32, i32
  }
  func.func @transform_2(%arg0: i32, %arg1: i32) -> (i32, i32, i32) {
    %c0_i32 = arith.constant 0 : i32
    %c0_i32_0 = arith.constant 0 : i32
    return %arg0, %c0_i32, %arg1 : i32, i32, i32
  }
  func.func @transform_3(%arg0: i32, %arg1: i32) -> (i32, i32, i32) {
    %c0_i32 = arith.constant 0 : i32
    %c0_i32_0 = arith.constant 0 : i32
    return %arg0, %c0_i32, %arg1 : i32, i32, i32
  }
  func.func @transform_4(%arg0: i32, %arg1: i32) -> (i32, i32, i32) {
    %c0_i32 = arith.constant 0 : i32
    %c0_i32_0 = arith.constant 0 : i32
    return %arg0, %c0_i32, %arg1 : i32, i32, i32
  }
}

</mosaic_0001>

<llo_original>
// kernel: tpu_custom_call.1
$region0: #{tpu_custom_call.1}
  #allocation0 [shape = 'u32[]', space=smem, size = 0x4, offset = 0x4, fixed_abs, tag = 'smem constant byte address 0x4 - core index']
  #allocation1 [shape = 'u32[144,128]{1,0:T(1,128)}', space=vmem, size = 0x12000, scoped, tag = 'internal scratch']
  %s0 = inlined_call_operand.hbm [shape: f32[2,4,256], index: 0, kind: input, shape index: {}]
  %s1 = inlined_call_operand.hbm [shape: f32[2,1,256], index: 1, kind: input, shape index: {}]
  %s2 = inlined_call_operand.hbm [shape: f32[2,4,256], index: 2, kind: input, shape index: {}]
  %s3 = inlined_call_operand.hbm [shape: f32[2,4,256], index: 3, kind: output, shape index: {0}]
  %s4 = inlined_call_operand.hbm [shape: f32[2,4,256], index: 4, kind: output, shape index: {1}]
  %5 = xla_tuple %s3, %s4
  %s6 = sld [smem:[#allocation0]]
  $region65: #{tpu_custom_call.1} parent=0
    _
  %s8 = ssub.s32 1, %s6
  %s9 = scalar_select 0, %s8, %s6
  $region1: #{tpu_custom_call.1} parent=0
    #allocation2 [shape = 'u8[4096]{0}', space=vmem, size = 0x1000, scoped, tag = 'input window, operand 0']
    #allocation3 [shape = 's32[2]{0}', space=sflag, size = 0x8, scoped, tag = 'scoped memory for tpu_custom_call.1']
    #allocation4 [shape = 's32[2]{0}', space=sflag, size = 0x8, scoped, tag = 'scoped memory for tpu_custom_call.1']
    #allocation5 [shape = 'u8[1024]{0}', space=vmem, size = 0x400, scoped, tag = 'input window, operand 1']
    #allocation6 [shape = 's32[2]{0}', space=sflag, size = 0x8, scoped, tag = 'scoped memory for tpu_custom_call.1']
    #allocation7 [shape = 'u8[4096]{0}', space=vmem, size = 0x1000, scoped, tag = 'input window, operand 2']
    #allocation8 [shape = 'u8[4096]{0}', space=vmem, size = 0x1000, scoped, tag = 'output window, operand 0']
    #allocation9 [shape = 'u8[4096]{0}', space=vmem, size = 0x1000, scoped, tag = 'output window, operand 1']
    #allocation10 [shape = 's32[2]{0}', space=sflag, size = 0x8, scoped, tag = 'scoped memory for tpu_custom_call.1']
    %10 = vsyncpa [#allocation3], 0
    %s11 = scalar_lea.sflag [#allocation3], 1
    %12 = vsyncpa %s11, 0
    %13 = vsyncpa [#allocation6], 0
    %s14 = scalar_lea.sflag [#allocation6], 1
    %15 = vsyncpa %s14, 0
    %16 = vsyncpa [#allocation4], 0
    %s17 = scalar_lea.sflag [#allocation4], 1
    %18 = vsyncpa %s17, 0
    %19 = vsyncpa [#allocation10], 0
    %s20 = scalar_lea.sflag [#allocation10], 1
    %21 = vsyncpa %s20, 0
    loop: start=0, step=1, limit=6
    $region2: #{tpu_custom_call.1} parent=1 // loop_pre_header
      _
    $region3: #{tpu_custom_call.1} parent=1 // loop_header
      %s23 = sphi 0, %s27
      %p24 = scmp.ge.s32.totalorder %s23, 6
      %s30 = sphi 0, %s42
      %s31 = sphi 0, %s38
      %s32 = sphi 0, %s30
      %s33 = sphi 0, %s31
      %s34 = sphi 0, %s32
      %s35 = sphi 0, %s33
      %s47 = sphi 0, %s49
      %s50 = sphi 0, %s47
      %s51 = sphi 0, %s50
      %s67 = sphi 0, %s51
      %s75 = sphi 0, %s77
      %s78 = sphi 0, %s75
      %s79 = sphi 0, %s78
      %s95 = sphi 0, %s79
      %s103 = sphi 0, %s105
      %s106 = sphi 0, %s103
      %s107 = sphi 0, %s106
      %s123 = sphi 0, %s107
      %s131 = sphi 0, %s133
      %s134 = sphi 0, %s131
      %s135 = sphi 0, %s134
      %s151 = sphi 0, %s135
      %s159 = sphi 0, %s161
      %s162 = sphi 0, %s159
      %s163 = sphi 0, %s162
      %s179 = sphi 0, %s163
    $region4: #{tpu_custom_call.1} parent=1 // loop_header_branch
      %26 = sbr.rel (%p24) target = $region8
    $region5: #{tpu_custom_call.1} parent=1 // loop_body
      %s28 = ssub.s32 %s23, 1
      %s29 = ssub.s32 %s23, 2
      %s36 = sadd.s32 1, %s31
      %p37 = scmp.ge.s32.totalorder %s36, 2
      %s38 = scalar_select %p37, 0, %s36
      %s39 = sadd.s32 1, %s30
      %s40 = scalar_select %p37, %s39, %s30
      %p41 = scmp.ge.s32.totalorder %s40, 2
      %s42 = scalar_select %p41, 0, %s40
      %s43 = ssub.s32 %s30, %s42
      %s44 = ssub.s32 %s31, %s38
      %s45 = sor.u32 %s43, %s44
      %p46 = scmp.eq.s32.totalorder %s45, 0
      %s48 = sadd.s32 %s47, 1
      %s49 = scalar_select %p46, %s47, %s48
      %p52 = pneg %p46
      %p53 = scmp.eq.s32.totalorder %s23, 3
      %p54 = por %p52, %p53
      %p55 = scmp.ne.s32.totalorder %s47, %s50
      %p56 = scmp.eq.s32.totalorder %s23, 0
      %p57 = por %p55, %p56
      %p58 = scmp.ne.s32.totalorder %s47, %s50
      %p59 = scmp.eq.s32.totalorder %s28, 3
      %p60 = por %p58, %p59
      %p61 = scmp.ne.s32.totalorder %s50, %s51
      %p62 = scmp.eq.s32.totalorder %s28, 0
      %p63 = por %p61, %p62
      %p64 = scmp.ne.s32.totalorder %s50, %s51
      %p65 = scmp.eq.s32.totalorder %s29, 3
      %p66 = por %p64, %p65
      %p68 = scmp.ne.s32.totalorder %s51, %s67
      %p69 = scmp.eq.s32.totalorder %s29, 0
      %p70 = por %p68, %p69
      %s71 = ssub.s32 %s30, %s42
      %s72 = ssub.s32 %s31, %s38
      %s73 = sor.u32 %s71, %s72
      %p74 = scmp.eq.s32.totalorder %s73, 0
      %s76 = sadd.s32 %s75, 1
      %s77 = scalar_select %p74, %s75, %s76
      %p80 = pneg %p74
      %p81 = scmp.eq.s32.totalorder %s23, 3
      %p82 = por %p80, %p81
      %p83 = scmp.ne.s32.totalorder %s75, %s78
      %p84 = scmp.eq.s32.totalorder %s23, 0
      %p85 = por %p83, %p84
      %p86 = scmp.ne.s32.totalorder %s75, %s78
      %p87 = scmp.eq.s32.totalorder %s28, 3
      %p88 = por %p86, %p87
      %p89 = scmp.ne.s32.totalorder %s78, %s79
      %p90 = scmp.eq.s32.totalorder %s28, 0
      %p91 = por %p89, %p90
      %p92 = scmp.ne.s32.totalorder %s78, %s79
      %p93 = scmp.eq.s32.totalorder %s29, 3
      %p94 = por %p92, %p93
      %p96 = scmp.ne.s32.totalorder %s79, %s95
      %p97 = scmp.eq.s32.totalorder %s29, 0
      %p98 = por %p96, %p97
      %s99 = ssub.s32 %s30, %s42
      %s100 = ssub.s32 %s31, %s38
      %s101 = sor.u32 %s99, %s100
      %p102 = scmp.eq.s32.totalorder %s101, 0
      %s104 = sadd.s32 %s103, 1
      %s105 = scalar_select %p102, %s103, %s104
      %p108 = pneg %p102
      %p109 = scmp.eq.s32.totalorder %s23, 3
      %p110 = por %p108, %p109
      %p111 = scmp.ne.s32.totalorder %s103, %s106
      %p112 = scmp.eq.s32.totalorder %s23, 0
      %p113 = por %p111, %p112
      %p114 = scmp.ne.s32.totalorder %s103, %s106
      %p115 = scmp.eq.s32.totalorder %s28, 3
      %p116 = por %p114, %p115
      %p117 = scmp.ne.s32.totalorder %s106, %s107
      %p118 = scmp.eq.s32.totalorder %s28, 0
      %p119 = por %p117, %p118
      %p120 = scmp.ne.s32.totalorder %s106, %s107
      %p121 = scmp.eq.s32.totalorder %s29, 3
      %p122 = por %p120, %p121
      %p124 = scmp.ne.s32.totalorder %s107, %s123
      %p125 = scmp.eq.s32.totalorder %s29, 0
      %p126 = por %p124, %p125
      %s127 = ssub.s32 %s30, %s42
      %s128 = ssub.s32 %s31, %s38
      %s129 = sor.u32 %s127, %s128
      %p130 = scmp.eq.s32.totalorder %s129, 0
      %s132 = sadd.s32 %s131, 1
      %s133 = scalar_select %p130, %s131, %s132
      %p136 = pneg %p130
      %p137 = scmp.eq.s32.totalorder %s23, 3
      %p138 = por %p136, %p137
      %p139 = scmp.ne.s32.totalorder %s131, %s134
      %p140 = scmp.eq.s32.totalorder %s23, 0
      %p141 = por %p139, %p140
      %p142 = scmp.ne.s32.totalorder %s131, %s134
      %p143 = scmp.eq.s32.totalorder %s28, 3
      %p144 = por %p142, %p143
      %p145 = scmp.ne.s32.totalorder %s134, %s135
      %p146 = scmp.eq.s32.totalorder %s28, 0
      %p147 = por %p145, %p146
      %p148 = scmp.ne.s32.totalorder %s134, %s135
      %p149 = scmp.eq.s32.totalorder %s29, 3
      %p150 = por %p148, %p149
      %p152 = scmp.ne.s32.totalorder %s135, %s151
      %p153 = scmp.eq.s32.totalorder %s29, 0
      %p154 = por %p152, %p153
      %s155 = ssub.s32 %s30, %s42
      %s156 = ssub.s32 %s31, %s38
      %s157 = sor.u32 %s155, %s156
      %p158 = scmp.eq.s32.totalorder %s157, 0
      %s160 = sadd.s32 %s159, 1
      %s161 = scalar_select %p158, %s159, %s160
      %p164 = pneg %p158
      %p165 = scmp.eq.s32.totalorder %s23, 3
      %p166 = por %p164, %p165
      %p167 = scmp.ne.s32.totalorder %s159, %s162
      %p168 = scmp.eq.s32.totalorder %s23, 0
      %p169 = por %p167, %p168
      %p170 = scmp.ne.s32.totalorder %s159, %s162
      %p171 = scmp.eq.s32.totalorder %s28, 3
      %p172 = por %p170, %p171
      %p173 = scmp.ne.s32.totalorder %s162, %s163
      %p174 = scmp.eq.s32.totalorder %s28, 0
      %p175 = por %p173, %p174
      %p176 = scmp.ne.s32.totalorder %s162, %s163
      %p177 = scmp.eq.s32.totalorder %s29, 3
      %p178 = por %p176, %p177
      %p180 = scmp.ne.s32.totalorder %s163, %s179
      %p181 = scmp.eq.s32.totalorder %s29, 0
      %p182 = por %p180, %p181
      %p183 = scmp.le.s32.totalorder 1, %s23
      %p184 = scmp.lt.s32.totalorder %s23, 5
      %p185 = pnand %p183, %p184
      %p186 = pneg %p185
      // Predicated region
      $region9: #{tpu_custom_call.1} parent=5 // pred_check
        _
      $region10: #{tpu_custom_call.1} parent=5 // pred_check_branch
        %188 = sbr.rel (%p185) target = $region12
      $region11: #{tpu_custom_call.1} parent=5 // pred_region
        %s189 = ssub.s32 %s23, 1
      $region12: #{tpu_custom_call.1} parent=5 // pred_fallthru
        _
      %p190 = scmp.lt.s32.totalorder %s23, 4
      // Predicated region
      $region13: #{tpu_custom_call.1} parent=5 // pred_check
        %p191 = pneg %p190
      $region14: #{tpu_custom_call.1} parent=5 // pred_check_branch
        %193 = sbr.rel (%p191) target = $region16
      $region15: #{tpu_custom_call.1} parent=5 // pred_region
        // Predicated region
        $region17: #{tpu_custom_call.1} parent=15 // pred_check
          %p194 = pneg %p57
        $region18: #{tpu_custom_call.1} parent=15 // pred_check_branch
          %196 = sbr.rel (%p194) target = $region20
        $region19: #{tpu_custom_call.1} parent=15 // pred_region
          %s197 = sand.u32 %s47, 1
          %s198 = scalar_lea.sflag [#allocation3], %s197
          %s199 = sand.u32 %s47, 1
          %s200 = smul.addr %s199, 4
          %s201 = scalar_lea.vmem [#allocation2], %s200
          %s203 = ssub.s32 64, 64
          %204 = vsyncadd %s198, %s203
          %s205 = smul.addr %s30, 2
          %s206 = sadd.s32 %s31, %s205
          %s207 = smul.addr %s206, 64
          %s208 = scalar_lea.hbm %s0, %s207
          %s210 = sshll.u32 %s201, 4
          %s211 = int_to_ptr.vmem [resolvable:$true] %s210
          %213 = dma.hbm_to_vmem [thread:$0]  %s208, 64, %s211, %s198
        $region20: #{tpu_custom_call.1} parent=15 // pred_fallthru
          _
        // Predicated region
        $region21: #{tpu_custom_call.1} parent=15 // pred_check
          %p214 = pneg %p85
        $region22: #{tpu_custom_call.1} parent=15 // pred_check_branch
          %216 = sbr.rel (%p214) target = $region24
        $region23: #{tpu_custom_call.1} parent=15 // pred_region
          %s217 = sand.u32 %s23, 1
          %s218 = scalar_lea.sflag [#allocation6], %s217
          %s219 = sand.u32 %s75, 1
          %s220 = scalar_lea.vmem [#allocation5], %s219
          %s222 = ssub.s32 16, 16
          %223 = vsyncadd %s218, %s222
          %s224 = smul.addr %s30, 2
          %s225 = sadd.s32 %s31, %s224
          %s226 = smul.addr %s225, 16
          %s227 = scalar_lea.hbm %s1, %s226
          %s229 = sshll.u32 %s220, 4
          %s230 = int_to_ptr.vmem [resolvable:$true] %s229
          %232 = dma.hbm_to_vmem [thread:$0]  %s227, 16, %s230, %s218
        $region24: #{tpu_custom_call.1} parent=15 // pred_fallthru
          _
        // Predicated region
        $region25: #{tpu_custom_call.1} parent=15 // pred_check
          %p233 = pneg %p113
        $region26: #{tpu_custom_call.1} parent=15 // pred_check_branch
          %235 = sbr.rel (%p233) target = $region28
        $region27: #{tpu_custom_call.1} parent=15 // pred_region
          %s236 = sand.u32 %s23, 1
          %s237 = scalar_lea.sflag [#allocation6], %s236
          %s238 = sand.u32 %s103, 1
          %s239 = smul.addr %s238, 4
          %s240 = scalar_lea.vmem [#allocation7], %s239
          %s242 = ssub.s32 64, 64
          %243 = vsyncadd %s237, %s242
          %s244 = smul.addr %s30, 2
          %s245 = sadd.s32 %s31, %s244
          %s246 = smul.addr %s245, 64
          %s247 = scalar_lea.hbm %s2, %s246
          %s249 = sshll.u32 %s240, 4
          %s250 = int_to_ptr.vmem [resolvable:$true] %s249
          %252 = dma.hbm_to_vmem [thread:$0]  %s247, 64, %s250, %s237
        $region28: #{tpu_custom_call.1} parent=15 // pred_fallthru
          _
      $region16: #{tpu_custom_call.1} parent=5 // pred_fallthru
        _
      %p253 = scmp.le.s32.totalorder 1, %s23
      %p254 = scmp.lt.s32.totalorder %s23, 5
      %p255 = pnand %p253, %p254
      %p256 = pneg %p255
      // Predicated region
      $region29: #{tpu_custom_call.1} parent=5 // pred_check
        _
      $region30: #{tpu_custom_call.1} parent=5 // pred_check_branch
        %258 = sbr.rel (%p255) target = $region32
      $region31: #{tpu_custom_call.1} parent=5 // pred_region
        %s259 = ssub.s32 %s23, 1
        %s260 = sand.u32 %s50, 1
        %s261 = scalar_lea.sflag [#allocation3], %s260
        %s262 = sand.u32 %s50, 1
        %s263 = smul.addr %s262, 4
        %s264 = scalar_lea.vmem [#allocation2], %s263
        // Predicated region
        $region33: #{tpu_custom_call.1} parent=31 // pred_check
          %p265 = pneg %p63
        $region34: #{tpu_custom_call.1} parent=31 // pred_check_branch
          %267 = sbr.rel (%p265) target = $region36
        $region35: #{tpu_custom_call.1} parent=31 // pred_region
          %268 = dma.done %s261, 64
        $region36: #{tpu_custom_call.1} parent=31 // pred_fallthru
          _
        %s269 = sand.u32 %s28, 1
        %s270 = scalar_lea.sflag [#allocation6], %s269
        %s271 = sand.u32 %s78, 1
        %s272 = scalar_lea.vmem [#allocation5], %s271
        // Predicated region
        $region37: #{tpu_custom_call.1} parent=31 // pred_check
          %p273 = pneg %p91
        $region38: #{tpu_custom_call.1} parent=31 // pred_check_branch
          %275 = sbr.rel (%p273) target = $region40
        $region39: #{tpu_custom_call.1} parent=31 // pred_region
          %276 = dma.done %s270, 16
        $region40: #{tpu_custom_call.1} parent=31 // pred_fallthru
          _
        %s277 = sand.u32 %s28, 1
        %s278 = scalar_lea.sflag [#allocation6], %s277
        %s279 = sand.u32 %s106, 1
        %s280 = smul.addr %s279, 4
        %s281 = scalar_lea.vmem [#allocation7], %s280
        // Predicated region
        $region41: #{tpu_custom_call.1} parent=31 // pred_check
          %p282 = pneg %p119
        $region42: #{tpu_custom_call.1} parent=31 // pred_check_branch
          %284 = sbr.rel (%p282) target = $region44
        $region43: #{tpu_custom_call.1} parent=31 // pred_region
          %285 = dma.done %s278, 64
        $region44: #{tpu_custom_call.1} parent=31 // pred_fallthru
          _
        %s286 = sand.u32 %s50, 1
        %s287 = scalar_lea.sflag [#allocation3], %s286
        %s288 = sand.u32 %s50, 1
        %s289 = smul.addr %s288, 4
        %s290 = scalar_lea.vmem [#allocation2], %s289
        %p291 = pneg %p63
        %p292 = pneg %p60
        %s293 = sand.u32 %s28, 1
        %s294 = scalar_lea.sflag [#allocation6], %s293
        %s295 = sand.u32 %s78, 1
        %s296 = scalar_lea.vmem [#allocation5], %s295
        %p297 = pneg %p91
        %p298 = pneg %p88
        %s299 = sand.u32 %s28, 1
        %s300 = scalar_lea.sflag [#allocation6], %s299
        %s301 = sand.u32 %s106, 1
        %s302 = smul.addr %s301, 4
        %s303 = scalar_lea.vmem [#allocation7], %s302
        %p304 = pneg %p119
        %p305 = pneg %p116
        %p306 = pneg %p147
        %p307 = pneg %p144
        %s308 = sand.u32 %s134, 1
        %s309 = scalar_lea.sflag [#allocation4], %s308
        %s310 = sand.u32 %s134, 1
        %s311 = smul.addr %s310, 4
        %s312 = scalar_lea.vmem [#allocation8], %s311
        %p313 = pneg %p175
        %p314 = pneg %p172
        %s315 = sand.u32 %s162, 1
        %s316 = scalar_lea.sflag [#allocation10], %s315
        %s317 = sand.u32 %s162, 1
        %s318 = smul.addr %s317, 4
        %s319 = scalar_lea.vmem [#allocation9], %s318
        %v320 = vld [vmem:[%s272] sm:$0x1]
        %v321 = vsub.f32 0.0, %v320
        %v322 = vmul.f32 %v321, 1.442695
        %v323 = vpow.pop %v322
        %v324 = vadd.f32 %v323, 1.0
        %v325 = vrcp.pop %v324
        %v326 = vmul.f32 1.0, %v325
        %v327 = vld [vmem:[%s264] sm:$0xf]
        %v328 = vsub.f32 0.0, %v327
        %v329 = vmul.f32 %v328, 1.442695
        %v330 = vpow.pop %v329
        %v331 = vadd.f32 %v330, 1.0
        %v332 = vrcp.pop %v331
        %v333 = vmul.f32 1.0, %v332
        %v335 = vlaneseq
        %v336 = vshrl.u32 %v335, 7
        %v337 = vsub.s32 0, %v336
        %v338 = vrot.slane %v326, %v337
        %v340 = vmul.f32 %v333, %v338
        %v341 = vrsqrt.pop %v340
        %v342 = vmul.f32 %v340, %v341
        %vm343 = vcmp.eq.f32.partialorder %v340, inf
        %v344 = vsel %vm343, %v340, %v342
        %vm345 = vcmp.eq.f32.partialorder %v340, 0.0
        %v346 = vand.u32 %v340, 2147483648
        %v347 = vsel %vm345, %v346, %v344
        %348 = vst [vmem:[%s312] sm:$0xf] %v347
        %s349 = smul.u32 %s33, 128
        %v350 = vlaneseq
        %v351 = vand.u32 %v350, 127
        %v352 = vstv %s349
        %v353 = vadd.s32 %v352, %v351
        %v354 = vcvt.s32.f32 %v353
        %v355 = vadd.f32 %v354, 0.5
        %v356 = vmul.f32 %v355, 0.0625
        %v357 = vfloor.f32 %v356
        %v358 = vmul.f32 %v357, 16.0
        %v359 = vsub.f32 %v354, %v358
        %v360 = vmul.f32 %v359, 8.0
        %v361 = vadd.f32 %v360, 4.0
        %v362 = vmul.f32 %v357, 8.0
        %v363 = vadd.f32 %v362, 4.0
        %v364 = vld [vmem:[%s281] sm:$0x1]
        %v365 = vsub.f32 %v361, %v364
        %366 = vst [vmem:[%s319] sm:$0x1] %v365
        %v367 = vld [vmem:[%s281 + $0x1] sm:$0x1]
        %v368 = vsub.f32 %v363, %v367
        %369 = vst [vmem:[%s319 + $0x1] sm:$0x1] %v368
        %v370 = vld [vmem:[%s281 + $0x2] sm:$0x1]
        %v371 = vadd.f32 %v361, %v370
        %372 = vst [vmem:[%s319 + $0x2] sm:$0x1] %v371
        %v373 = vld [vmem:[%s281 + $0x3] sm:$0x1]
        %v374 = vadd.f32 %v363, %v373
        %375 = vst [vmem:[%s319 + $0x3] sm:$0x1] %v374
        %s376 = sand.u32 %s134, 1
        %s377 = scalar_lea.sflag [#allocation4], %s376
        %s378 = sand.u32 %s134, 1
        %s379 = smul.addr %s378, 4
        %s380 = scalar_lea.vmem [#allocation8], %s379
        %s381 = sand.u32 %s162, 1
        %s382 = scalar_lea.sflag [#allocation10], %s381
        %s383 = sand.u32 %s162, 1
        %s384 = smul.addr %s383, 4
        %s385 = scalar_lea.vmem [#allocation9], %s384
        // Predicated region
        $region45: #{tpu_custom_call.1} parent=31 // pred_check
          %p386 = pneg %p144
        $region46: #{tpu_custom_call.1} parent=31 // pred_check_branch
          %388 = sbr.rel (%p386) target = $region48
        $region47: #{tpu_custom_call.1} parent=31 // pred_region
          %s390 = ssub.s32 64, 64
          %391 = vsyncadd %s377, %s390
          %s392 = smul.addr %s32, 2
          %s393 = sadd.s32 %s33, %s392
          %s394 = smul.addr %s393, 64
          %s395 = scalar_lea.hbm %s3, %s394
          %s397 = sshll.u32 %s380, 4
          %s398 = int_to_ptr.vmem [resolvable:$true] %s397
          %400 = dma.vmem_to_hbm [thread:$0]  %s398, 64, %s395, %s377
        $region48: #{tpu_custom_call.1} parent=31 // pred_fallthru
          _
        // Predicated region
        $region49: #{tpu_custom_call.1} parent=31 // pred_check
          %p401 = pneg %p172
        $region50: #{tpu_custom_call.1} parent=31 // pred_check_branch
          %403 = sbr.rel (%p401) target = $region52
        $region51: #{tpu_custom_call.1} parent=31 // pred_region
          %s405 = ssub.s32 64, 64
          %406 = vsyncadd %s382, %s405
          %s407 = smul.addr %s32, 2
          %s408 = sadd.s32 %s33, %s407
          %s409 = smul.addr %s408, 64
          %s410 = scalar_lea.hbm %s4, %s409
          %s412 = sshll.u32 %s385, 4
          %s413 = int_to_ptr.vmem [resolvable:$true] %s412
          %415 = dma.vmem_to_hbm [thread:$0]  %s413, 64, %s410, %s382
        $region52: #{tpu_custom_call.1} parent=31 // pred_fallthru
          _
      $region32: #{tpu_custom_call.1} parent=5 // pred_fallthru
        _
      %p416 = scmp.le.s32.totalorder 2, %s23
      // Predicated region
      $region53: #{tpu_custom_call.1} parent=5 // pred_check
        %p417 = pneg %p416
      $region54: #{tpu_custom_call.1} parent=5 // pred_check_branch
        %419 = sbr.rel (%p417) target = $region56
      $region55: #{tpu_custom_call.1} parent=5 // pred_region
        %s420 = ssub.s32 %s23, 2
        // Predicated region
        $region57: #{tpu_custom_call.1} parent=55 // pred_check
          %p421 = pneg %p150
        $region58: #{tpu_custom_call.1} parent=55 // pred_check_branch
          %423 = sbr.rel (%p421) target = $region60
        $region59: #{tpu_custom_call.1} parent=55 // pred_region
          %s424 = sand.u32 %s135, 1
          %s425 = scalar_lea.sflag [#allocation4], %s424
          %s426 = sand.u32 %s135, 1
          %s427 = smul.addr %s426, 4
          %s428 = scalar_lea.vmem [#allocation8], %s427
          %429 = dma.done %s425, 64
        $region60: #{tpu_custom_call.1} parent=55 // pred_fallthru
          _
        // Predicated region
        $region61: #{tpu_custom_call.1} parent=55 // pred_check
          %p430 = pneg %p178
        $region62: #{tpu_custom_call.1} parent=55 // pred_check_branch
          %432 = sbr.rel (%p430) target = $region64
        $region63: #{tpu_custom_call.1} parent=55 // pred_region
          %s433 = sand.u32 %s163, 1
          %s434 = scalar_lea.sflag [#allocation10], %s433
          %s435 = sand.u32 %s163, 1
          %s436 = smul.addr %s435, 4
          %s437 = scalar_lea.vmem [#allocation9], %s436
          %438 = dma.done %s434, 64
        $region64: #{tpu_custom_call.1} parent=55 // pred_fallthru
          _
      $region56: #{tpu_custom_call.1} parent=5 // pred_fallthru
        _
    $region6: #{tpu_custom_call.1} parent=1 // loop_footer
      %s27 = sadd.s32 1, %s23
    $region7: #{tpu_custom_call.1} parent=1 // loop_footer_branch
      %22 = sbr.rel target = $region3
    $region8: #{tpu_custom_call.1} parent=1 // loop_exit
      _
    %439 = vsyncpa [#allocation3], 1
    %s440 = scalar_lea.sflag [#allocation3], 1
    %441 = vsyncpa %s440, 1
    %442 = vsyncpa [#allocation6], 1
    %s443 = scalar_lea.sflag [#allocation6], 1
    %444 = vsyncpa %s443, 1
    %445 = vsyncpa [#allocation4], 1
    %s446 = scalar_lea.sflag [#allocation4], 1
    %447 = vsyncpa %s446, 1
    %448 = vsyncpa [#allocation10], 1
    %s449 = scalar_lea.sflag [#allocation10], 1
    %450 = vsyncpa %s449, 1

</llo_original>
